<compile_context>
chip_gen: v7x
topology: tpu7x:2x2x1
jax: 0.10.0
libtpu: 0.0.40
codegen_flags: <defaults>
</compile_context>

<pallas_src>
import math

import jax
import jax.numpy as jnp
from jax.experimental import pallas as pl
from jax.experimental.pallas import tpu as pltpu


def _level_cfgs(h, w, num_levels):
    """Static per-level pooling geometry, identical math to the PyTorch module."""
    cfgs = []
    for i in range(num_levels):
        level = i + 1
        k0h, k0w = math.ceil(h / level), math.ceil(w / level)
        ph = math.floor((k0h * level - h + 1) / 2)
        pw = math.floor((k0w * level - w + 1) / 2)
        h_new, w_new = h + 2 * ph, w + 2 * pw
        kh, kw = math.ceil(h_new / level), math.ceil(w_new / level)
        sh, sw = math.floor(h_new / level), math.floor(w_new / level)
        oh = (h_new - kh) // sh + 1          # torch floor mode, no implicit pad
        ow = (w_new - kw) // sw + 1
        cfgs.append(dict(kh=kh, kw=kw, sh=sh, sw=sw, ph=ph, pw=pw, oh=oh, ow=ow))
    return cfgs


def _vmem_capacity_bytes():
    """Best-effort trace-time VMEM capacity query (per-generation tiling)."""
    try:
        info = pltpu.get_tpu_info()
        for attr in ("vmem_capacity_bytes", "vmem_size_bytes"):
            cap = getattr(info, attr, None)
            if cap:
                return int(cap)
    except Exception:
        pass
    return 64 * 1024 * 1024   # conservative default (v7x per-TC VMEM)


def _make_spp_kernel(cfgs, pool_type, h, w):
    """Fused kernel: all pyramid levels from one NCHW VMEM-resident tile."""

    def kernel(x_ref, *out_refs):
        nb = x_ref.shape[0]
        ch = x_ref.shape[1]
        # Lane-axis (W) column ids, hoisted once per kernel invocation.
        col_ids = jax.lax.broadcasted_iota(jnp.int32, (1, 1, w), 2)
        neg_inf = jnp.float32(-jnp.inf)

        for cfg, o_ref in zip(cfgs, out_refs):
            kh, kw = cfg["kh"], cfg["kw"]
            sh, sw = cfg["sh"], cfg["sw"]
            ph, pw = cfg["ph"], cfg["pw"]
            oh, ow = cfg["oh"], cfg["ow"]
            inv_area = jnp.float32(1.0 / float(kh * kw))   # hoisted constant
            vals = []
            for oi in range(oh):
                r0p, r1p = oi * sh, oi * sh + kh              # padded coords
                r0, r1 = max(r0p - ph, 0), min(r1p - ph, h)    # valid rows (static)
                rows_valid = r1 > r0
                band = None
                if rows_valid:
                    # Static Ref view (pl.ds): load only the needed H rows, full
                    # lane-aligned W band; single upcast to f32 (v5e-friendly).
                    band_rows = x_ref[:, :, pl.ds(r0, r1 - r0), :].astype(jnp.float32)
                    if pool_type == "max_pool":
                        band = jnp.max(band_rows, axis=2)      # (Nb, C, W)
                    else:
                        band = jnp.sum(band_rows, axis=2)      # (Nb, C, W)
                for oj in range(ow):
                    c0p, c1p = oj * sw, oj * sw + kw
                    c0, c1 = max(c0p - pw, 0), min(c1p - pw, w)
                    touches_pad = (r0p < ph or r1p > h + ph or
                                   c0p < pw or c1p > w + pw)
                    if (not rows_valid) or (c1 <= c0):
                        # Window lies entirely inside the zero padding.
                        vals.append(jnp.zeros((nb, ch), jnp.float32))
                        continue
                    # Static lane mask selects the valid W columns of the band.
                    col_mask = (col_ids >= c0) & (col_ids < c1)
                    if pool_type == "max_pool":
                        v = jnp.max(jnp.where(col_mask, band, neg_inf), axis=-1)
                        if touches_pad:
                            # ZeroPad2d zeros participate in the max.
                            v = jnp.maximum(v, 0.0)
                    else:
                        # avg: padded zeros add nothing to the sum; divide by
                        # the full kh*kw window area (torch semantics).
                        v = jnp.sum(jnp.where(col_mask, band, 0.0), axis=-1)
                        v = v * inv_area
                    vals.append(v)
            # One dense store per level: (Nb, C, oh*ow), positions in (oi, oj)
            # row-major order == torch's (C, oh, ow) flatten order.
            out = jnp.stack(vals, axis=-1)
            o_ref[...] = out.astype(o_ref.dtype)

    return kernel


def spp_layer(x, num_levels, pool_type="max_pool"):
    """Exact re-implementation of SPPLayer.forward (NCHW input, no extra HBM pass)."""
    n, c, h, w = x.shape
    cfgs = _level_cfgs(h, w, num_levels)
    itemsize = jnp.dtype(x.dtype).itemsize

    # Per-generation input-tile budget: ~VMEM/8, clamped to [4, 16] MiB
    # (=> 16 MiB on 128-MiB v5e/v6e, 8 MiB on 64-MiB v7x).
    vmem_cap = _vmem_capacity_bytes()
    tile_budget = int(min(16 * 1024 * 1024, max(4 * 1024 * 1024, vmem_cap // 8)))

    # Largest divisor of n whose tile fits the budget, capped at cdiv(n, 2) so
    # the grid has >= 2 steps (v7x megacore sharding + live double-buffering).
    per_sample = c * h * w * itemsize
    max_bn = max(1, pl.cdiv(n, 2)) if n >= 2 else 1
    block_n = 1
    for d in range(min(n, max_bn), 0, -1):
        if n % d == 0 and d * per_sample <= tile_budget:
            block_n = d
            break
    # TODO(synk): if a single sample's C*H*W tile exceeds tile_budget (huge
    # images), add an H-band grid axis aligned to the coarsest level's window
    # boundaries instead of loading the whole sample per step.

    in_tile = block_n * per_sample
    out_tile = sum(block_n * c * cfg["oh"] * cfg["ow"] * itemsize for cfg in cfgs)
    vmem_limit = int(min(max(4 * 1024 * 1024, 3 * (in_tile + out_tile)),
                         max(4 * 1024 * 1024, int(0.9 * vmem_cap))))

    grid = (n // block_n,)
    kernel = _make_spp_kernel(cfgs, pool_type, h, w)

    out_shapes = tuple(
        jax.ShapeDtypeStruct((n, c, cfg["oh"] * cfg["ow"]), x.dtype)
        for cfg in cfgs)
    out_specs = tuple(
        pl.BlockSpec((block_n, c, cfg["oh"] * cfg["ow"]), lambda b: (b, 0, 0))
        for cfg in cfgs)

    outs = pl.pallas_call(
        kernel,
        out_shape=out_shapes,
        grid=grid,
        in_specs=[pl.BlockSpec((block_n, c, h, w), lambda b: (b, 0, 0, 0))],
        out_specs=out_specs,
        compiler_params=pltpu.CompilerParams(
            dimension_semantics=("parallel",),   # shards batch over v7x's 2 TCs
            vmem_limit_bytes=vmem_limit),
    )(x)

    # Per level the kernel already emits torch's (C, oh, ow) flatten order, so
    # the epilogue is just reshape + concat (no transposes, negligible size).
    return jnp.concatenate([o.reshape(n, -1) for o in outs], axis=1)


def _reference_spp(x, num_levels, pool_type="max_pool"):
    """Independent pure-JAX reference (pad + reduce_window on NCHW) for validation."""
    n, c, h, w = x.shape
    pieces = []
    for i in range(num_levels):
        level = i + 1
        k0 = (math.ceil(h / level), math.ceil(w / level))
        pad = (math.floor((k0[0] * level - h + 1) / 2),
               math.floor((k0[1] * level - w + 1) / 2))
        x_new = jnp.pad(x, ((0, 0), (0, 0),
                            (pad[0], pad[0]), (pad[1], pad[1])))
        h_new, w_new = h + 2 * pad[0], w + 2 * pad[1]
        kh, kw = math.ceil(h_new / level), math.ceil(w_new / level)
        sh, sw = math.floor(h_new / level), math.floor(w_new / level)
        if pool_type == "max_pool":
            t = jax.lax.reduce_window(x_new, -jnp.inf, jax.lax.max,
                                      (1, 1, kh, kw), (1, 1, sh, sw), "VALID")
        else:
            s = jax.lax.reduce_window(x_new, 0.0, jax.lax.add,
                                      (1, 1, kh, kw), (1, 1, sh, sw), "VALID")
            t = s / (kh * kw)
        pieces.append(t.reshape(n, -1))
    return jnp.concatenate(pieces, axis=1)


if __name__ == "__main__":
    # SPPLayer has no learnable parameters — nothing to initialize.
    num_levels = 3

    key = jax.random.PRNGKey(0)
    x = jax.random.normal(key, (2, 4, 16, 16), dtype=jnp.float32)  # N, C, H, W

    out_max = jax.block_until_ready(spp_layer(x, num_levels, "max_pool"))
    out_avg = jax.block_until_ready(spp_layer(x, num_levels, "avg_pool"))

    # Expected flattened size: C * sum(level^2) = 4 * (1 + 4 + 9) = 56
    exp_feats = 4 * sum((i + 1) ** 2 for i in range(num_levels))
    assert out_max.shape == (2, exp_feats)
    assert out_avg.shape == (2, exp_feats)

    ref_max = _reference_spp(x, num_levels, "max_pool")
    ref_avg = _reference_spp(x, num_levels, "avg_pool")
    assert jnp.allclose(out_max, ref_max, atol=1e-6, rtol=1e-6), "max_pool mismatch"
    assert jnp.allclose(out_avg, ref_avg, atol=1e-5, rtol=1e-5), "avg_pool mismatch"

    print("KERNEL_OK")
</pallas_src>

<mosaic_0001>
module attributes {stable_mosaic.version = 11 : i64} {
  func.func @kernel(%arg0: i32, %arg1: memref<1x4x16x16xf32, #tpu.memory_space<vmem>>, %arg2: memref<1x4x1xf32, #tpu.memory_space<vmem>>, %arg3: memref<1x4x4xf32, #tpu.memory_space<vmem>>, %arg4: memref<1x4x9xf32, #tpu.memory_space<vmem>>) attributes {dimension_semantics = [#tpu.dimension_semantics<parallel>], iteration_bounds = array<i64: 2>, scalar_prefetch = 0 : i64, scratch_operands = 0 : i64, tpu.core_type = #tpu.core_type<tc>, window_params = [{transform_indices = @transform_0, window_bounds = array<i64: 1, 4, 16, 16>}, {transform_indices = @transform_1, window_bounds = array<i64: 1, 4, 1>}, {transform_indices = @transform_2, window_bounds = array<i64: 1, 4, 4>}, {transform_indices = @transform_3, window_bounds = array<i64: 1, 4, 9>}]} {
    %0 = tpu.iota {dimensions = array<i32: 2>} : vector<1x1x16xi32>
    %c0 = arith.constant 0 : index
    %c0_0 = arith.constant 0 : index
    %c0_1 = arith.constant 0 : index
    %c0_2 = arith.constant 0 : index
    %1 = vector.load %arg1[%c0, %c0_0, %c0_1, %c0_2] : memref<1x4x16x16xf32, #tpu.memory_space<vmem>>, vector<1x4x16x16xf32>
    %cst = arith.constant dense<0xFF800000> : vector<1x4x16xf32>
    %2 = vector.multi_reduction <maximumf>, %1, %cst [2] : vector<1x4x16x16xf32> to vector<1x4x16xf32>
    %c0_i32 = arith.constant 0 : i32
    %3 = vector.broadcast %c0_i32 : i32 to vector<1x1x16xi32>
    %4 = arith.cmpi sge, %0, %3 : vector<1x1x16xi32>
    %c16_i32 = arith.constant 16 : i32
    %5 = vector.broadcast %c16_i32 : i32 to vector<1x1x16xi32>
    %6 = arith.cmpi slt, %0, %5 : vector<1x1x16xi32>
    %7 = arith.andi %4, %6 : vector<1x1x16xi1>
    %cst_3 = arith.constant 0xFF800000 : f32
    %8 = vector.shape_cast %7 : vector<1x1x16xi1> to vector<1x1x16xi1>
    %9 = vector.broadcast %8 : vector<1x1x16xi1> to vector<1x4x16xi1>
    %10 = vector.broadcast %cst_3 : f32 to vector<1x4x16xf32>
    %11 = arith.select %9, %2, %10 : vector<1x4x16xi1>, vector<1x4x16xf32>
    %cst_4 = arith.constant dense<0xFF800000> : vector<1x4xf32>
    %12 = vector.multi_reduction <maximumf>, %11, %cst_4 [2] : vector<1x4x16xf32> to vector<1x4xf32>
    %13 = vector.shape_cast %12 : vector<1x4xf32> to vector<1x4x1xf32>
    %c0_5 = arith.constant 0 : index
    %c0_6 = arith.constant 0 : index
    %c0_7 = arith.constant 0 : index
    %14 = vector.load %arg2[%c0_5, %c0_6, %c0_7] : memref<1x4x1xf32, #tpu.memory_space<vmem>>, vector<1x4x1xf32>
    tpu.vector_store %arg2[%c0_5, %c0_6, %c0_7], %13 {strides = array<i32>} : memref<1x4x1xf32, #tpu.memory_space<vmem>>, vector<1x4x1xf32>,
    %c0_8 = arith.constant 0 : index
    %c0_9 = arith.constant 0 : index
    %c0_10 = arith.constant 0 : index
    %c0_11 = arith.constant 0 : index
    %15 = vector.load %arg1[%c0_8, %c0_9, %c0_10, %c0_11] : memref<1x4x16x16xf32, #tpu.memory_space<vmem>>, vector<1x4x8x16xf32>
    %cst_12 = arith.constant dense<0xFF800000> : vector<1x4x16xf32>
    %16 = vector.multi_reduction <maximumf>, %15, %cst_12 [2] : vector<1x4x8x16xf32> to vector<1x4x16xf32>
    %c0_i32_13 = arith.constant 0 : i32
    %17 = vector.broadcast %c0_i32_13 : i32 to vector<1x1x16xi32>
    %18 = arith.cmpi sge, %0, %17 : vector<1x1x16xi32>
    %c8_i32 = arith.constant 8 : i32
    %19 = vector.broadcast %c8_i32 : i32 to vector<1x1x16xi32>
    %20 = arith.cmpi slt, %0, %19 : vector<1x1x16xi32>
    %21 = arith.andi %18, %20 : vector<1x1x16xi1>
    %cst_14 = arith.constant 0xFF800000 : f32
    %22 = vector.shape_cast %21 : vector<1x1x16xi1> to vector<1x1x16xi1>
    %23 = vector.broadcast %22 : vector<1x1x16xi1> to vector<1x4x16xi1>
    %24 = vector.broadcast %cst_14 : f32 to vector<1x4x16xf32>
    %25 = arith.select %23, %16, %24 : vector<1x4x16xi1>, vector<1x4x16xf32>
    %cst_15 = arith.constant dense<0xFF800000> : vector<1x4xf32>
    %26 = vector.multi_reduction <maximumf>, %25, %cst_15 [2] : vector<1x4x16xf32> to vector<1x4xf32>
    %c8_i32_16 = arith.constant 8 : i32
    %27 = vector.broadcast %c8_i32_16 : i32 to vector<1x1x16xi32>
    %28 = arith.cmpi sge, %0, %27 : vector<1x1x16xi32>
    %c16_i32_17 = arith.constant 16 : i32
    %29 = vector.broadcast %c16_i32_17 : i32 to vector<1x1x16xi32>
    %30 = arith.cmpi slt, %0, %29 : vector<1x1x16xi32>
    %31 = arith.andi %28, %30 : vector<1x1x16xi1>
    %cst_18 = arith.constant 0xFF800000 : f32
    %32 = vector.shape_cast %31 : vector<1x1x16xi1> to vector<1x1x16xi1>
    %33 = vector.broadcast %32 : vector<1x1x16xi1> to vector<1x4x16xi1>
    %34 = vector.broadcast %cst_18 : f32 to vector<1x4x16xf32>
    %35 = arith.select %33, %16, %34 : vector<1x4x16xi1>, vector<1x4x16xf32>
    %cst_19 = arith.constant dense<0xFF800000> : vector<1x4xf32>
    %36 = vector.multi_reduction <maximumf>, %35, %cst_19 [2] : vector<1x4x16xf32> to vector<1x4xf32>
    %c0_20 = arith.constant 0 : index
    %c0_21 = arith.constant 0 : index
    %c8 = arith.constant 8 : index
    %c0_22 = arith.constant 0 : index
    %37 = vector.load %arg1[%c0_20, %c0_21, %c8, %c0_22] : memref<1x4x16x16xf32, #tpu.memory_space<vmem>>, vector<1x4x8x16xf32>
    %cst_23 = arith.constant dense<0xFF800000> : vector<1x4x16xf32>
    %38 = vector.multi_reduction <maximumf>, %37, %cst_23 [2] : vector<1x4x8x16xf32> to vector<1x4x16xf32>
    %c0_i32_24 = arith.constant 0 : i32
    %39 = vector.broadcast %c0_i32_24 : i32 to vector<1x1x16xi32>
    %40 = arith.cmpi sge, %0, %39 : vector<1x1x16xi32>
    %c8_i32_25 = arith.constant 8 : i32
    %41 = vector.broadcast %c8_i32_25 : i32 to vector<1x1x16xi32>
    %42 = arith.cmpi slt, %0, %41 : vector<1x1x16xi32>
    %43 = arith.andi %40, %42 : vector<1x1x16xi1>
    %cst_26 = arith.constant 0xFF800000 : f32
    %44 = vector.shape_cast %43 : vector<1x1x16xi1> to vector<1x1x16xi1>
    %45 = vector.broadcast %44 : vector<1x1x16xi1> to vector<1x4x16xi1>
    %46 = vector.broadcast %cst_26 : f32 to vector<1x4x16xf32>
    %47 = arith.select %45, %38, %46 : vector<1x4x16xi1>, vector<1x4x16xf32>
    %cst_27 = arith.constant dense<0xFF800000> : vector<1x4xf32>
    %48 = vector.multi_reduction <maximumf>, %47, %cst_27 [2] : vector<1x4x16xf32> to vector<1x4xf32>
    %c8_i32_28 = arith.constant 8 : i32
    %49 = vector.broadcast %c8_i32_28 : i32 to vector<1x1x16xi32>
    %50 = arith.cmpi sge, %0, %49 : vector<1x1x16xi32>
    %c16_i32_29 = arith.constant 16 : i32
    %51 = vector.broadcast %c16_i32_29 : i32 to vector<1x1x16xi32>
    %52 = arith.cmpi slt, %0, %51 : vector<1x1x16xi32>
    %53 = arith.andi %50, %52 : vector<1x1x16xi1>
    %cst_30 = arith.constant 0xFF800000 : f32
    %54 = vector.shape_cast %53 : vector<1x1x16xi1> to vector<1x1x16xi1>
    %55 = vector.broadcast %54 : vector<1x1x16xi1> to vector<1x4x16xi1>
    %56 = vector.broadcast %cst_30 : f32 to vector<1x4x16xf32>
    %57 = arith.select %55, %38, %56 : vector<1x4x16xi1>, vector<1x4x16xf32>
    %cst_31 = arith.constant dense<0xFF800000> : vector<1x4xf32>
    %58 = vector.multi_reduction <maximumf>, %57, %cst_31 [2] : vector<1x4x16xf32> to vector<1x4xf32>
    %59 = vector.shape_cast %26 : vector<1x4xf32> to vector<1x4x1xf32>
    %60 = vector.shape_cast %36 : vector<1x4xf32> to vector<1x4x1xf32>
    %61 = vector.shape_cast %48 : vector<1x4xf32> to vector<1x4x1xf32>
    %62 = vector.shape_cast %58 : vector<1x4xf32> to vector<1x4x1xf32>
    %63 = tpu.concatenate %59, %60, %61, %62 in 2 : vector<1x4x1xf32>, vector<1x4x1xf32>, vector<1x4x1xf32>, vector<1x4x1xf32> -> vector<1x4x4xf32>
    %c0_32 = arith.constant 0 : index
    %c0_33 = arith.constant 0 : index
    %c0_34 = arith.constant 0 : index
    %64 = vector.load %arg3[%c0_32, %c0_33, %c0_34] : memref<1x4x4xf32, #tpu.memory_space<vmem>>, vector<1x4x4xf32>
    tpu.vector_store %arg3[%c0_32, %c0_33, %c0_34], %63 {strides = array<i32>} : memref<1x4x4xf32, #tpu.memory_space<vmem>>, vector<1x4x4xf32>,
    %c0_35 = arith.constant 0 : index
    %c0_36 = arith.constant 0 : index
    %c0_37 = arith.constant 0 : index
    %c0_38 = arith.constant 0 : index
    %65 = vector.load %arg1[%c0_35, %c0_36, %c0_37, %c0_38] : memref<1x4x16x16xf32, #tpu.memory_space<vmem>>, vector<1x4x5x16xf32>
    %cst_39 = arith.constant dense<0xFF800000> : vector<1x4x16xf32>
    %66 = vector.multi_reduction <maximumf>, %65, %cst_39 [2] : vector<1x4x5x16xf32> to vector<1x4x16xf32>
    %c0_i32_40 = arith.constant 0 : i32
    %67 = vector.broadcast %c0_i32_40 : i32 to vector<1x1x16xi32>
    %68 = arith.cmpi sge, %0, %67 : vector<1x1x16xi32>
    %c5_i32 = arith.constant 5 : i32
    %69 = vector.broadcast %c5_i32 : i32 to vector<1x1x16xi32>
    %70 = arith.cmpi slt, %0, %69 : vector<1x1x16xi32>
    %71 = arith.andi %68, %70 : vector<1x1x16xi1>
    %cst_41 = arith.constant 0xFF800000 : f32
    %72 = vector.shape_cast %71 : vector<1x1x16xi1> to vector<1x1x16xi1>
    %73 = vector.broadcast %72 : vector<1x1x16xi1> to vector<1x4x16xi1>
    %74 = vector.broadcast %cst_41 : f32 to vector<1x4x16xf32>
    %75 = arith.select %73, %66, %74 : vector<1x4x16xi1>, vector<1x4x16xf32>
    %cst_42 = arith.constant dense<0xFF800000> : vector<1x4xf32>
    %76 = vector.multi_reduction <maximumf>, %75, %cst_42 [2] : vector<1x4x16xf32> to vector<1x4xf32>
    %cst_43 = arith.constant 0.000000e+00 : f32
    %77 = vector.broadcast %cst_43 : f32 to vector<1x4xf32>
    %78 = arith.maximumf %76, %77 : vector<1x4xf32>
    %c5_i32_44 = arith.constant 5 : i32
    %79 = vector.broadcast %c5_i32_44 : i32 to vector<1x1x16xi32>
    %80 = arith.cmpi sge, %0, %79 : vector<1x1x16xi32>
    %c11_i32 = arith.constant 11 : i32
    %81 = vector.broadcast %c11_i32 : i32 to vector<1x1x16xi32>
    %82 = arith.cmpi slt, %0, %81 : vector<1x1x16xi32>
    %83 = arith.andi %80, %82 : vector<1x1x16xi1>
    %cst_45 = arith.constant 0xFF800000 : f32
    %84 = vector.shape_cast %83 : vector<1x1x16xi1> to vector<1x1x16xi1>
    %85 = vector.broadcast %84 : vector<1x1x16xi1> to vector<1x4x16xi1>
    %86 = vector.broadcast %cst_45 : f32 to vector<1x4x16xf32>
    %87 = arith.select %85, %66, %86 : vector<1x4x16xi1>, vector<1x4x16xf32>
    %cst_46 = arith.constant dense<0xFF800000> : vector<1x4xf32>
    %88 = vector.multi_reduction <maximumf>, %87, %cst_46 [2] : vector<1x4x16xf32> to vector<1x4xf32>
    %cst_47 = arith.constant 0.000000e+00 : f32
    %89 = vector.broadcast %cst_47 : f32 to vector<1x4xf32>
    %90 = arith.maximumf %88, %89 : vector<1x4xf32>
    %c11_i32_48 = arith.constant 11 : i32
    %91 = vector.broadcast %c11_i32_48 : i32 to vector<1x1x16xi32>
    %92 = arith.cmpi sge, %0, %91 : vector<1x1x16xi32>
    %c16_i32_49 = arith.constant 16 : i32
    %93 = vector.broadcast %c16_i32_49 : i32 to vector<1x1x16xi32>
    %94 = arith.cmpi slt, %0, %93 : vector<1x1x16xi32>
    %95 = arith.andi %92, %94 : vector<1x1x16xi1>
    %cst_50 = arith.constant 0xFF800000 : f32
    %96 = vector.shape_cast %95 : vector<1x1x16xi1> to vector<1x1x16xi1>
    %97 = vector.broadcast %96 : vector<1x1x16xi1> to vector<1x4x16xi1>
    %98 = vector.broadcast %cst_50 : f32 to vector<1x4x16xf32>
    %99 = arith.select %97, %66, %98 : vector<1x4x16xi1>, vector<1x4x16xf32>
    %cst_51 = arith.constant dense<0xFF800000> : vector<1x4xf32>
    %100 = vector.multi_reduction <maximumf>, %99, %cst_51 [2] : vector<1x4x16xf32> to vector<1x4xf32>
    %cst_52 = arith.constant 0.000000e+00 : f32
    %101 = vector.broadcast %cst_52 : f32 to vector<1x4xf32>
    %102 = arith.maximumf %100, %101 : vector<1x4xf32>
    %c0_53 = arith.constant 0 : index
    %c0_54 = arith.constant 0 : index
    %c5 = arith.constant 5 : index
    %c0_55 = arith.constant 0 : index
    %103 = vector.load %arg1[%c0_53, %c0_54, %c5, %c0_55] : memref<1x4x16x16xf32, #tpu.memory_space<vmem>>, vector<1x4x6x16xf32>
    %cst_56 = arith.constant dense<0xFF800000> : vector<1x4x16xf32>
    %104 = vector.multi_reduction <maximumf>, %103, %cst_56 [2] : vector<1x4x6x16xf32> to vector<1x4x16xf32>
    %c0_i32_57 = arith.constant 0 : i32
    %105 = vector.broadcast %c0_i32_57 : i32 to vector<1x1x16xi32>
    %106 = arith.cmpi sge, %0, %105 : vector<1x1x16xi32>
    %c5_i32_58 = arith.constant 5 : i32
    %107 = vector.broadcast %c5_i32_58 : i32 to vector<1x1x16xi32>
    %108 = arith.cmpi slt, %0, %107 : vector<1x1x16xi32>
    %109 = arith.andi %106, %108 : vector<1x1x16xi1>
    %cst_59 = arith.constant 0xFF800000 : f32
    %110 = vector.shape_cast %109 : vector<1x1x16xi1> to vector<1x1x16xi1>
    %111 = vector.broadcast %110 : vector<1x1x16xi1> to vector<1x4x16xi1>
    %112 = vector.broadcast %cst_59 : f32 to vector<1x4x16xf32>
    %113 = arith.select %111, %104, %112 : vector<1x4x16xi1>, vector<1x4x16xf32>
    %cst_60 = arith.constant dense<0xFF800000> : vector<1x4xf32>
    %114 = vector.multi_reduction <maximumf>, %113, %cst_60 [2] : vector<1x4x16xf32> to vector<1x4xf32>
    %cst_61 = arith.constant 0.000000e+00 : f32
    %115 = vector.broadcast %cst_61 : f32 to vector<1x4xf32>
    %116 = arith.maximumf %114, %115 : vector<1x4xf32>
    %c5_i32_62 = arith.constant 5 : i32
    %117 = vector.broadcast %c5_i32_62 : i32 to vector<1x1x16xi32>
    %118 = arith.cmpi sge, %0, %117 : vector<1x1x16xi32>
    %c11_i32_63 = arith.constant 11 : i32
    %119 = vector.broadcast %c11_i32_63 : i32 to vector<1x1x16xi32>
    %120 = arith.cmpi slt, %0, %119 : vector<1x1x16xi32>
    %121 = arith.andi %118, %120 : vector<1x1x16xi1>
    %cst_64 = arith.constant 0xFF800000 : f32
    %122 = vector.shape_cast %121 : vector<1x1x16xi1> to vector<1x1x16xi1>
    %123 = vector.broadcast %122 : vector<1x1x16xi1> to vector<1x4x16xi1>
    %124 = vector.broadcast %cst_64 : f32 to vector<1x4x16xf32>
    %125 = arith.select %123, %104, %124 : vector<1x4x16xi1>, vector<1x4x16xf32>
    %cst_65 = arith.constant dense<0xFF800000> : vector<1x4xf32>
    %126 = vector.multi_reduction <maximumf>, %125, %cst_65 [2] : vector<1x4x16xf32> to vector<1x4xf32>
    %c11_i32_66 = arith.constant 11 : i32
    %127 = vector.broadcast %c11_i32_66 : i32 to vector<1x1x16xi32>
    %128 = arith.cmpi sge, %0, %127 : vector<1x1x16xi32>
    %c16_i32_67 = arith.constant 16 : i32
    %129 = vector.broadcast %c16_i32_67 : i32 to vector<1x1x16xi32>
    %130 = arith.cmpi slt, %0, %129 : vector<1x1x16xi32>
    %131 = arith.andi %128, %130 : vector<1x1x16xi1>
    %cst_68 = arith.constant 0xFF800000 : f32
    %132 = vector.shape_cast %131 : vector<1x1x16xi1> to vector<1x1x16xi1>
    %133 = vector.broadcast %132 : vector<1x1x16xi1> to vector<1x4x16xi1>
    %134 = vector.broadcast %cst_68 : f32 to vector<1x4x16xf32>
    %135 = arith.select %133, %104, %134 : vector<1x4x16xi1>, vector<1x4x16xf32>
    %cst_69 = arith.constant dense<0xFF800000> : vector<1x4xf32>
    %136 = vector.multi_reduction <maximumf>, %135, %cst_69 [2] : vector<1x4x16xf32> to vector<1x4xf32>
    %cst_70 = arith.constant 0.000000e+00 : f32
    %137 = vector.broadcast %cst_70 : f32 to vector<1x4xf32>
    %138 = arith.maximumf %136, %137 : vector<1x4xf32>
    %c0_71 = arith.constant 0 : index
    %c0_72 = arith.constant 0 : index
    %c11 = arith.constant 11 : index
    %c0_73 = arith.constant 0 : index
    %139 = vector.load %arg1[%c0_71, %c0_72, %c11, %c0_73] : memref<1x4x16x16xf32, #tpu.memory_space<vmem>>, vector<1x4x5x16xf32>
    %cst_74 = arith.constant dense<0xFF800000> : vector<1x4x16xf32>
    %140 = vector.multi_reduction <maximumf>, %139, %cst_74 [2] : vector<1x4x5x16xf32> to vector<1x4x16xf32>
    %c0_i32_75 = arith.constant 0 : i32
    %141 = vector.broadcast %c0_i32_75 : i32 to vector<1x1x16xi32>
    %142 = arith.cmpi sge, %0, %141 : vector<1x1x16xi32>
    %c5_i32_76 = arith.constant 5 : i32
    %143 = vector.broadcast %c5_i32_76 : i32 to vector<1x1x16xi32>
    %144 = arith.cmpi slt, %0, %143 : vector<1x1x16xi32>
    %145 = arith.andi %142, %144 : vector<1x1x16xi1>
    %cst_77 = arith.constant 0xFF800000 : f32
    %146 = vector.shape_cast %145 : vector<1x1x16xi1> to vector<1x1x16xi1>
    %147 = vector.broadcast %146 : vector<1x1x16xi1> to vector<1x4x16xi1>
    %148 = vector.broadcast %cst_77 : f32 to vector<1x4x16xf32>
    %149 = arith.select %147, %140, %148 : vector<1x4x16xi1>, vector<1x4x16xf32>
    %cst_78 = arith.constant dense<0xFF800000> : vector<1x4xf32>
    %150 = vector.multi_reduction <maximumf>, %149, %cst_78 [2] : vector<1x4x16xf32> to vector<1x4xf32>
    %cst_79 = arith.constant 0.000000e+00 : f32
    %151 = vector.broadcast %cst_79 : f32 to vector<1x4xf32>
    %152 = arith.maximumf %150, %151 : vector<1x4xf32>
    %c5_i32_80 = arith.constant 5 : i32
    %153 = vector.broadcast %c5_i32_80 : i32 to vector<1x1x16xi32>
    %154 = arith.cmpi sge, %0, %153 : vector<1x1x16xi32>
    %c11_i32_81 = arith.constant 11 : i32
    %155 = vector.broadcast %c11_i32_81 : i32 to vector<1x1x16xi32>
    %156 = arith.cmpi slt, %0, %155 : vector<1x1x16xi32>
    %157 = arith.andi %154, %156 : vector<1x1x16xi1>
    %cst_82 = arith.constant 0xFF800000 : f32
    %158 = vector.shape_cast %157 : vector<1x1x16xi1> to vector<1x1x16xi1>
    %159 = vector.broadcast %158 : vector<1x1x16xi1> to vector<1x4x16xi1>
    %160 = vector.broadcast %cst_82 : f32 to vector<1x4x16xf32>
    %161 = arith.select %159, %140, %160 : vector<1x4x16xi1>, vector<1x4x16xf32>
    %cst_83 = arith.constant dense<0xFF800000> : vector<1x4xf32>
    %162 = vector.multi_reduction <maximumf>, %161, %cst_83 [2] : vector<1x4x16xf32> to vector<1x4xf32>
    %cst_84 = arith.constant 0.000000e+00 : f32
    %163 = vector.broadcast %cst_84 : f32 to vector<1x4xf32>
    %164 = arith.maximumf %162, %163 : vector<1x4xf32>
    %c11_i32_85 = arith.constant 11 : i32
    %165 = vector.broadcast %c11_i32_85 : i32 to vector<1x1x16xi32>
    %166 = arith.cmpi sge, %0, %165 : vector<1x1x16xi32>
    %c16_i32_86 = arith.constant 16 : i32
    %167 = vector.broadcast %c16_i32_86 : i32 to vector<1x1x16xi32>
    %168 = arith.cmpi slt, %0, %167 : vector<1x1x16xi32>
    %169 = arith.andi %166, %168 : vector<1x1x16xi1>
    %cst_87 = arith.constant 0xFF800000 : f32
    %170 = vector.shape_cast %169 : vector<1x1x16xi1> to vector<1x1x16xi1>
    %171 = vector.broadcast %170 : vector<1x1x16xi1> to vector<1x4x16xi1>
    %172 = vector.broadcast %cst_87 : f32 to vector<1x4x16xf32>
    %173 = arith.select %171, %140, %172 : vector<1x4x16xi1>, vector<1x4x16xf32>
    %cst_88 = arith.constant dense<0xFF800000> : vector<1x4xf32>
    %174 = vector.multi_reduction <maximumf>, %173, %cst_88 [2] : vector<1x4x16xf32> to vector<1x4xf32>
    %cst_89 = arith.constant 0.000000e+00 : f32
    %175 = vector.broadcast %cst_89 : f32 to vector<1x4xf32>
    %176 = arith.maximumf %174, %175 : vector<1x4xf32>
    %177 = vector.shape_cast %78 : vector<1x4xf32> to vector<1x4x1xf32>
    %178 = vector.shape_cast %90 : vector<1x4xf32> to vector<1x4x1xf32>
    %179 = vector.shape_cast %102 : vector<1x4xf32> to vector<1x4x1xf32>
    %180 = vector.shape_cast %116 : vector<1x4xf32> to vector<1x4x1xf32>
    %181 = vector.shape_cast %126 : vector<1x4xf32> to vector<1x4x1xf32>
    %182 = vector.shape_cast %138 : vector<1x4xf32> to vector<1x4x1xf32>
    %183 = vector.shape_cast %152 : vector<1x4xf32> to vector<1x4x1xf32>
    %184 = vector.shape_cast %164 : vector<1x4xf32> to vector<1x4x1xf32>
    %185 = vector.shape_cast %176 : vector<1x4xf32> to vector<1x4x1xf32>
    %186 = tpu.concatenate %177, %178, %179, %180, %181, %182, %183, %184, %185 in 2 : vector<1x4x1xf32>, vector<1x4x1xf32>, vector<1x4x1xf32>, vector<1x4x1xf32>, vector<1x4x1xf32>, vector<1x4x1xf32>, vector<1x4x1xf32>, vector<1x4x1xf32>, vector<1x4x1xf32> -> vector<1x4x9xf32>
    %c0_90 = arith.constant 0 : index
    %c0_91 = arith.constant 0 : index
    %c0_92 = arith.constant 0 : index
    %187 = vector.load %arg4[%c0_90, %c0_91, %c0_92] : memref<1x4x9xf32, #tpu.memory_space<vmem>>, vector<1x4x9xf32>
    tpu.vector_store %arg4[%c0_90, %c0_91, %c0_92], %186 {strides = array<i32>} : memref<1x4x9xf32, #tpu.memory_space<vmem>>, vector<1x4x9xf32>,
    return
  }
  func.func @transform_0(%arg0: i32) -> (i32, i32, i32, i32) {
    %c0_i32 = arith.constant 0 : i32
    %c0_i32_0 = arith.constant 0 : i32
    %c0_i32_1 = arith.constant 0 : i32
    %c0_i32_2 = arith.constant 0 : i32
    return %arg0, %c0_i32, %c0_i32_0, %c0_i32_1 : i32, i32, i32, i32
  }
  func.func @transform_1(%arg0: i32) -> (i32, i32, i32) {
    %c0_i32 = arith.constant 0 : i32
    %c0_i32_0 = arith.constant 0 : i32
    %c0_i32_1 = arith.constant 0 : i32
    return %arg0, %c0_i32, %c0_i32_0 : i32, i32, i32
  }
  func.func @transform_2(%arg0: i32) -> (i32, i32, i32) {
    %c0_i32 = arith.constant 0 : i32
    %c0_i32_0 = arith.constant 0 : i32
    %c0_i32_1 = arith.constant 0 : i32
    return %arg0, %c0_i32, %c0_i32_0 : i32, i32, i32
  }
  func.func @transform_3(%arg0: i32) -> (i32, i32, i32) {
    %c0_i32 = arith.constant 0 : i32
    %c0_i32_0 = arith.constant 0 : i32
    %c0_i32_1 = arith.constant 0 : i32
    return %arg0, %c0_i32, %c0_i32_0 : i32, i32, i32
  }
}

</mosaic_0001>

<llo_original>
// kernel: tpu_custom_call.1
$region0: #{tpu_custom_call.1}
  #allocation0 [shape = 'u32[]', space=smem, size = 0x4, offset = 0x4, fixed_abs, tag = 'smem constant byte address 0x4 - core index']
  #allocation1 [shape = 'u32[144,128]{1,0:T(1,128)}', space=vmem, size = 0x12000, scoped, tag = 'internal scratch']
  %s0 = inlined_call_operand.hbm [shape: f32[2,4,16,16], index: 0, kind: input, shape index: {}]
  %s1 = inlined_call_operand.vmem [shape: f32[2,4,1], index: 1, kind: output, shape index: {0}]
  %s2 = inlined_call_operand.hbm [shape: f32[2,4,4], index: 2, kind: output, shape index: {1}]
  %s3 = inlined_call_operand.hbm [shape: f32[2,4,9], index: 3, kind: output, shape index: {2}]
  %4 = xla_tuple %s1, %s2, %s3
  %s5 = sld [smem:[#allocation0]]
  $region57: #{tpu_custom_call.1} parent=0
    _
  %s7 = ssub.s32 1, %s5
  %s8 = scalar_select 0, %s7, %s5
  $region1: #{tpu_custom_call.1} parent=0
    #allocation2 [shape = 'u8[65536]{0}', space=vmem, size = 0x10000, scoped, tag = 'input window, operand 0']
    #allocation3 [shape = 's32[2]{0}', space=sflag, size = 0x8, scoped, tag = 'scoped memory for tpu_custom_call.1']
    #allocation4 [shape = 's32[2]{0}', space=sflag, size = 0x8, scoped, tag = 'scoped memory for tpu_custom_call.1']
    #allocation5 [shape = 'u8[4096]{0}', space=vmem, size = 0x1000, scoped, tag = 'output window, operand 1']
    #allocation6 [shape = 'u8[4096]{0}', space=vmem, size = 0x1000, scoped, tag = 'output window, operand 2']
    #allocation7 [shape = 's32[2]{0}', space=sflag, size = 0x8, scoped, tag = 'scoped memory for tpu_custom_call.1']
    %9 = vsyncpa [#allocation3], 0
    %s10 = scalar_lea.sflag [#allocation3], 1
    %11 = vsyncpa %s10, 0
    %12 = vsyncpa [#allocation4], 0
    %s13 = scalar_lea.sflag [#allocation4], 1
    %14 = vsyncpa %s13, 0
    %15 = vsyncpa [#allocation7], 0
    %s16 = scalar_lea.sflag [#allocation7], 1
    %17 = vsyncpa %s16, 0
    loop: start=0, step=1, limit=4
    $region2: #{tpu_custom_call.1} parent=1 // loop_pre_header
      _
    $region3: #{tpu_custom_call.1} parent=1 // loop_header
      %s19 = sphi 0, %s23
      %p20 = scmp.ge.s32.totalorder %s19, 4
      %s29 = sphi 0, %s31
      %s32 = sphi 0, %s29
      %s33 = sphi 0, %s32
      %s49 = sphi 0, %s33
      %s55 = sphi 0, %s57
      %s58 = sphi 0, %s55
      %s59 = sphi 0, %s58
      %s75 = sphi 0, %s59
      %s81 = sphi 0, %s83
      %s84 = sphi 0, %s81
      %s85 = sphi 0, %s84
      %s101 = sphi 0, %s85
      %s107 = sphi 0, %s109
      %s110 = sphi 0, %s107
      %s111 = sphi 0, %s110
      %s127 = sphi 0, %s111
    $region4: #{tpu_custom_call.1} parent=1 // loop_header_branch
      %22 = sbr.rel (%p20) target = $region8
    $region5: #{tpu_custom_call.1} parent=1 // loop_body
      %s24 = ssub.s32 %s19, 1
      %s25 = ssub.s32 %s19, 2
      %s26 = sadd.s32 %s19, 1
      %s27 = ssub.s32 %s19, %s26
      %p28 = scmp.eq.s32.totalorder %s27, 0
      %s30 = sadd.s32 %s29, 1
      %s31 = scalar_select %p28, %s29, %s30
      %p34 = pneg %p28
      %p35 = scmp.eq.s32.totalorder %s19, 1
      %p36 = por %p34, %p35
      %p37 = scmp.ne.s32.totalorder %s29, %s32
      %p38 = scmp.eq.s32.totalorder %s19, 0
      %p39 = por %p37, %p38
      %p40 = scmp.ne.s32.totalorder %s29, %s32
      %p41 = scmp.eq.s32.totalorder %s24, 1
      %p42 = por %p40, %p41
      %p43 = scmp.ne.s32.totalorder %s32, %s33
      %p44 = scmp.eq.s32.totalorder %s24, 0
      %p45 = por %p43, %p44
      %p46 = scmp.ne.s32.totalorder %s32, %s33
      %p47 = scmp.eq.s32.totalorder %s25, 1
      %p48 = por %p46, %p47
      %p50 = scmp.ne.s32.totalorder %s33, %s49
      %p51 = scmp.eq.s32.totalorder %s25, 0
      %p52 = por %p50, %p51
      %s53 = ssub.s32 %s19, %s26
      %p54 = scmp.eq.s32.totalorder %s53, 0
      %s56 = sadd.s32 %s55, 1
      %s57 = scalar_select %p54, %s55, %s56
      %p60 = pneg %p54
      %p61 = scmp.eq.s32.totalorder %s19, 1
      %p62 = por %p60, %p61
      %p63 = scmp.ne.s32.totalorder %s55, %s58
      %p64 = scmp.eq.s32.totalorder %s19, 0
      %p65 = por %p63, %p64
      %p66 = scmp.ne.s32.totalorder %s55, %s58
      %p67 = scmp.eq.s32.totalorder %s24, 1
      %p68 = por %p66, %p67
      %p69 = scmp.ne.s32.totalorder %s58, %s59
      %p70 = scmp.eq.s32.totalorder %s24, 0
      %p71 = por %p69, %p70
      %p72 = scmp.ne.s32.totalorder %s58, %s59
      %p73 = scmp.eq.s32.totalorder %s25, 1
      %p74 = por %p72, %p73
      %p76 = scmp.ne.s32.totalorder %s59, %s75
      %p77 = scmp.eq.s32.totalorder %s25, 0
      %p78 = por %p76, %p77
      %s79 = ssub.s32 %s19, %s26
      %p80 = scmp.eq.s32.totalorder %s79, 0
      %s82 = sadd.s32 %s81, 1
      %s83 = scalar_select %p80, %s81, %s82
      %p86 = pneg %p80
      %p87 = scmp.eq.s32.totalorder %s19, 1
      %p88 = por %p86, %p87
      %p89 = scmp.ne.s32.totalorder %s81, %s84
      %p90 = scmp.eq.s32.totalorder %s19, 0
      %p91 = por %p89, %p90
      %p92 = scmp.ne.s32.totalorder %s81, %s84
      %p93 = scmp.eq.s32.totalorder %s24, 1
      %p94 = por %p92, %p93
      %p95 = scmp.ne.s32.totalorder %s84, %s85
      %p96 = scmp.eq.s32.totalorder %s24, 0
      %p97 = por %p95, %p96
      %p98 = scmp.ne.s32.totalorder %s84, %s85
      %p99 = scmp.eq.s32.totalorder %s25, 1
      %p100 = por %p98, %p99
      %p102 = scmp.ne.s32.totalorder %s85, %s101
      %p103 = scmp.eq.s32.totalorder %s25, 0
      %p104 = por %p102, %p103
      %s105 = ssub.s32 %s19, %s26
      %p106 = scmp.eq.s32.totalorder %s105, 0
      %s108 = sadd.s32 %s107, 1
      %s109 = scalar_select %p106, %s107, %s108
      %p112 = pneg %p106
      %p113 = scmp.eq.s32.totalorder %s19, 1
      %p114 = por %p112, %p113
      %p115 = scmp.ne.s32.totalorder %s107, %s110
      %p116 = scmp.eq.s32.totalorder %s19, 0
      %p117 = por %p115, %p116
      %p118 = scmp.ne.s32.totalorder %s107, %s110
      %p119 = scmp.eq.s32.totalorder %s24, 1
      %p120 = por %p118, %p119
      %p121 = scmp.ne.s32.totalorder %s110, %s111
      %p122 = scmp.eq.s32.totalorder %s24, 0
      %p123 = por %p121, %p122
      %p124 = scmp.ne.s32.totalorder %s110, %s111
      %p125 = scmp.eq.s32.totalorder %s25, 1
      %p126 = por %p124, %p125
      %p128 = scmp.ne.s32.totalorder %s111, %s127
      %p129 = scmp.eq.s32.totalorder %s25, 0
      %p130 = por %p128, %p129
      %p131 = scmp.le.s32.totalorder 1, %s19
      %p132 = scmp.lt.s32.totalorder %s19, 3
      %p133 = pnand %p131, %p132
      %p134 = pneg %p133
      // Predicated region
      $region9: #{tpu_custom_call.1} parent=5 // pred_check
        _
      $region10: #{tpu_custom_call.1} parent=5 // pred_check_branch
        %136 = sbr.rel (%p133) target = $region12
      $region11: #{tpu_custom_call.1} parent=5 // pred_region
        %s137 = ssub.s32 %s19, 1
      $region12: #{tpu_custom_call.1} parent=5 // pred_fallthru
        _
      %p138 = scmp.lt.s32.totalorder %s19, 2
      // Predicated region
      $region13: #{tpu_custom_call.1} parent=5 // pred_check
        %p139 = pneg %p138
      $region14: #{tpu_custom_call.1} parent=5 // pred_check_branch
        %141 = sbr.rel (%p139) target = $region16
      $region15: #{tpu_custom_call.1} parent=5 // pred_region
        // Predicated region
        $region17: #{tpu_custom_call.1} parent=15 // pred_check
          %p142 = pneg %p39
        $region18: #{tpu_custom_call.1} parent=15 // pred_check_branch
          %144 = sbr.rel (%p142) target = $region20
        $region19: #{tpu_custom_call.1} parent=15 // pred_region
          %s145 = sand.u32 %s29, 1
          %s146 = scalar_lea.sflag [#allocation3], %s145
          %s147 = sand.u32 %s29, 1
          %s148 = smul.addr %s147, 64
          %s149 = scalar_lea.vmem [#allocation2], %s148
          %s151 = ssub.s32 1024, 1024
          %152 = vsyncadd %s146, %s151
          %s153 = smul.addr %s19, 8
          %s154 = smul.addr %s153, 128
          %s155 = scalar_lea.hbm %s0, %s154
          %s156 = sshll.u32 %s149, 4
          %s157 = int_to_ptr.vmem [resolvable:$true] %s156
          %162 = dma.hbm_to_vmem [thread:$0]  %s155, 1024, %s157, %s146, 128, 128, 8
        $region20: #{tpu_custom_call.1} parent=15 // pred_fallthru
          _
      $region16: #{tpu_custom_call.1} parent=5 // pred_fallthru
        _
      %p163 = scmp.le.s32.totalorder 1, %s19
      %p164 = scmp.lt.s32.totalorder %s19, 3
      %p165 = pnand %p163, %p164
      %p166 = pneg %p165
      // Predicated region
      $region21: #{tpu_custom_call.1} parent=5 // pred_check
        _
      $region22: #{tpu_custom_call.1} parent=5 // pred_check_branch
        %168 = sbr.rel (%p165) target = $region24
      $region23: #{tpu_custom_call.1} parent=5 // pred_region
        %s169 = ssub.s32 %s19, 1
        %s170 = sand.u32 %s32, 1
        %s171 = scalar_lea.sflag [#allocation3], %s170
        %s172 = sand.u32 %s32, 1
        %s173 = smul.addr %s172, 64
        %s174 = scalar_lea.vmem [#allocation2], %s173
        // Predicated region
        $region25: #{tpu_custom_call.1} parent=23 // pred_check
          %p175 = pneg %p45
        $region26: #{tpu_custom_call.1} parent=23 // pred_check_branch
          %177 = sbr.rel (%p175) target = $region28
        $region27: #{tpu_custom_call.1} parent=23 // pred_region
          %178 = dma.done %s171, 1024
        $region28: #{tpu_custom_call.1} parent=23 // pred_fallthru
          _
        %s179 = sand.u32 %s32, 1
        %s180 = scalar_lea.sflag [#allocation3], %s179
        %s181 = sand.u32 %s32, 1
        %s182 = smul.addr %s181, 64
        %s183 = scalar_lea.vmem [#allocation2], %s182
        %p184 = pneg %p45
        %p185 = pneg %p42
        %p186 = pneg %p71
        %p187 = pneg %p68
        %p188 = scmp.lt.s32.totalorder %s24, 1
        %s189 = scalar_select %p188, %s24, 1
        %s190 = smul.addr %s189, 4
        %s191 = scalar_lea.vmem %s1, %s190
        %p192 = pneg %p97
        %p193 = pneg %p94
        %s194 = sand.u32 %s84, 1
        %s195 = scalar_lea.sflag [#allocation4], %s194
        %s196 = sand.u32 %s84, 1
        %s197 = smul.addr %s196, 4
        %s198 = scalar_lea.vmem [#allocation5], %s197
        %p199 = pneg %p123
        %p200 = pneg %p120
        %s201 = sand.u32 %s110, 1
        %s202 = scalar_lea.sflag [#allocation7], %s201
        %s203 = sand.u32 %s110, 1
        %s204 = smul.addr %s203, 4
        %s205 = scalar_lea.vmem [#allocation6], %s204
        %p206 = scmp.lt.s32.totalorder %s24, 1
        %s207 = scalar_select %p206, %s24, 1
        %s208 = smul.addr %s207, 4
        %s209 = scalar_lea.vmem %s1, %s208
        %v210 = vlaneseq
        %v211 = vand.u32 %v210, 127
        %v212 = vld [vmem:[%s174] sm:$0xff]
        %v213 = vld [vmem:[%s174 + $0x8] sm:$0xff]
        %v214 = vld [vmem:[%s174 + $0x10] sm:$0xff]
        %v215 = vld [vmem:[%s174 + $0x18] sm:$0xff]
        %v216 = vld [vmem:[%s174 + $0x20] sm:$0xff]
        %v217 = vld [vmem:[%s174 + $0x28] sm:$0xff]
        %v218 = vld [vmem:[%s174 + $0x30] sm:$0xff]
        %v219 = vld [vmem:[%s174 + $0x38] sm:$0xff]
        %vm220 = vcmask 130048
        %v221 = vsel %vm220, %v212, -inf
        %v222 = vsel %vm220, %v213, -inf
        %v223 = vmax.f32 %v221, %v222
        %v224 = vrot.slane %v223, 4
        %v225 = vmax.f32 %v223, %v224
        %v226 = vrot.slane %v225, 2
        %v227 = vmax.f32 %v225, %v226
        %v228 = vrot.slane %v227, 1
        %v229 = vmax.f32 %v227, %v228
        %v230 = vsel %vm220, %v214, -inf
        %v231 = vsel %vm220, %v215, -inf
        %v232 = vmax.f32 %v230, %v231
        %v233 = vrot.slane %v232, 4
        %v234 = vmax.f32 %v232, %v233
        %v235 = vrot.slane %v234, 2
        %v236 = vmax.f32 %v234, %v235
        %v237 = vrot.slane %v236, 1
        %v238 = vmax.f32 %v236, %v237
        %v239 = vsel %vm220, %v216, -inf
        %v240 = vsel %vm220, %v217, -inf
        %v241 = vmax.f32 %v239, %v240
        %v242 = vrot.slane %v241, 4
        %v243 = vmax.f32 %v241, %v242
        %v244 = vrot.slane %v243, 2
        %v245 = vmax.f32 %v243, %v244
        %v246 = vrot.slane %v245, 1
        %v247 = vmax.f32 %v245, %v246
        %v248 = vsel %vm220, %v218, -inf
        %v249 = vsel %vm220, %v219, -inf
        %v250 = vmax.f32 %v248, %v249
        %v251 = vrot.slane %v250, 4
        %v252 = vmax.f32 %v250, %v251
        %v253 = vrot.slane %v252, 2
        %v254 = vmax.f32 %v252, %v253
        %v255 = vrot.slane %v254, 1
        %v256 = vmax.f32 %v254, %v255
        %vm257 = vcmp.ge.s32.totalorder %v211, 0
        %vm258 = vcmp.lt.s32.totalorder %v211, 16
        %vm259 = vmand %vm257, %vm258
        %v260 = vsel %vm259, 1, 0
        %vm261 = vcmp.eq.s32.totalorder %v260, 1
        %vm266 = vcmask 1041409
        %v267 = vsel %vm266, %v238, %v229
        %vm268 = vcmask 1042434
        %v269 = vsel %vm268, %v247, %v267
        %vm270 = vcmask 1043459
        %v271 = vsel %vm270, %v256, %v269
        %v273 = vsel %vm261, %v271, -inf
        %vm274 = vcmask 125952
        %v275 = vsel %vm274, %v273, -inf
        %276 = vmax.xlane.f32.xlu0 %v275
        %v277 = vpop.xlane.xlu0 %276
        %vm278 = vcmask 3072
        %279 = vst.msk [vmem:[%s209] sm:$0xf] %vm278, %v277
        %v280 = vld [vmem:[%s174] sm:$0xff]
        %v281 = vld [vmem:[%s174 + $0x10] sm:$0xff]
        %v282 = vld [vmem:[%s174 + $0x20] sm:$0xff]
        %v283 = vld [vmem:[%s174 + $0x30] sm:$0xff]
        %v284 = vsel %vm220, %v280, -inf
        %v285 = vrot.slane %v284, 4
        %v286 = vmax.f32 %v284, %v285
        %v287 = vrot.slane %v286, 2
        %v288 = vmax.f32 %v286, %v287
        %v289 = vrot.slane %v288, 1
        %v290 = vmax.f32 %v288, %v289
        %v291 = vsel %vm220, %v281, -inf
        %v292 = vrot.slane %v291, 4
        %v293 = vmax.f32 %v291, %v292
        %v294 = vrot.slane %v293, 2
        %v295 = vmax.f32 %v293, %v294
        %v296 = vrot.slane %v295, 1
        %v297 = vmax.f32 %v295, %v296
        %v298 = vsel %vm220, %v282, -inf
        %v299 = vrot.slane %v298, 4
        %v300 = vmax.f32 %v298, %v299
        %v301 = vrot.slane %v300, 2
        %v302 = vmax.f32 %v300, %v301
        %v303 = vrot.slane %v302, 1
        %v304 = vmax.f32 %v302, %v303
        %v305 = vsel %vm220, %v283, -inf
        %v306 = vrot.slane %v305, 4
        %v307 = vmax.f32 %v305, %v306
        %v308 = vrot.slane %v307, 2
        %v309 = vmax.f32 %v307, %v308
        %v310 = vrot.slane %v309, 1
        %v311 = vmax.f32 %v309, %v310
        %vm312 = vcmp.lt.s32.totalorder %v211, 8
        %vm313 = vmand %vm257, %vm312
        %v314 = vsel %vm313, 1, 0
        %vm315 = vcmp.eq.s32.totalorder %v314, 1
        %v320 = vsel %vm266, %v297, %v290
        %v321 = vsel %vm268, %v304, %v320
        %v322 = vsel %vm270, %v311, %v321
        %v324 = vsel %vm315, %v322, -inf
        %v325 = vsel %vm274, %v324, -inf
        %326 = vmax.xlane.f32.xlu0 %v325
        %v327 = vpop.xlane.xlu0 %326
        %vm328 = vcmp.ge.s32.totalorder %v211, 8
        %vm329 = vmand %vm328, %vm258
        %v330 = vsel %vm329, 1, 0
        %vm331 = vcmp.eq.s32.totalorder %v330, 1
        %v332 = vsel %vm331, %v322, -inf
        %v333 = vsel %vm274, %v332, -inf
        %334 = vmax.xlane.f32.xlu0 %v333
        %v335 = vpop.xlane.xlu0 %334
        %v336 = vld [vmem:[%s174 + $0x8] sm:$0xff]
        %v337 = vld [vmem:[%s174 + $0x18] sm:$0xff]
        %v338 = vld [vmem:[%s174 + $0x28] sm:$0xff]
        %v339 = vld [vmem:[%s174 + $0x38] sm:$0xff]
        %v340 = vsel %vm220, %v336, -inf
        %v341 = vrot.slane %v340, 4
        %v342 = vmax.f32 %v340, %v341
        %v343 = vrot.slane %v342, 2
        %v344 = vmax.f32 %v342, %v343
        %v345 = vrot.slane %v344, 1
        %v346 = vmax.f32 %v344, %v345
        %v347 = vsel %vm220, %v337, -inf
        %v348 = vrot.slane %v347, 4
        %v349 = vmax.f32 %v347, %v348
        %v350 = vrot.slane %v349, 2
        %v351 = vmax.f32 %v349, %v350
        %v352 = vrot.slane %v351, 1
        %v353 = vmax.f32 %v351, %v352
        %v354 = vsel %vm220, %v338, -inf
        %v355 = vrot.slane %v354, 4
        %v356 = vmax.f32 %v354, %v355
        %v357 = vrot.slane %v356, 2
        %v358 = vmax.f32 %v356, %v357
        %v359 = vrot.slane %v358, 1
        %v360 = vmax.f32 %v358, %v359
        %v361 = vsel %vm220, %v339, -inf
        %v362 = vrot.slane %v361, 4
        %v363 = vmax.f32 %v361, %v362
        %v364 = vrot.slane %v363, 2
        %v365 = vmax.f32 %v363, %v364
        %v366 = vrot.slane %v365, 1
        %v367 = vmax.f32 %v365, %v366
        %v372 = vsel %vm266, %v353, %v346
        %v373 = vsel %vm268, %v360, %v372
        %v374 = vsel %vm270, %v367, %v373
        %v376 = vsel %vm315, %v374, -inf
        %v377 = vsel %vm274, %v376, -inf
        %378 = vmax.xlane.f32.xlu0 %v377
        %v379 = vpop.xlane.xlu0 %378
        %v380 = vsel %vm331, %v374, -inf
        %v381 = vsel %vm274, %v380, -inf
        %382 = vmax.xlane.f32.xlu0 %v381
        %v383 = vpop.xlane.xlu0 %382
        %vm384 = vcmask 7168
        %v385 = vsel %vm384, %v327, %v335
        %vm386 = vcmask 15360
        %v387 = vsel %vm386, %v385, %v379
        %vm388 = vcmask 23552
        %v389 = vsel %vm388, %v387, %v383
        %vm390 = vcmask 27648
        %391 = vst.msk [vmem:[%s198] sm:$0xf] %vm390, %v389
        %v392 = vld [vmem:[%s174] sm:$0x1f]
        %v393 = vld [vmem:[%s174 + $0x10] sm:$0x1f]
        %v394 = vld [vmem:[%s174 + $0x20] sm:$0x1f]
        %v395 = vld [vmem:[%s174 + $0x30] sm:$0x1f]
        %vm396 = vcmask 126976
        %v397 = vsel %vm396, %v392, -inf
        %v398 = vrot.slane %v397, 4
        %v399 = vmax.f32 %v397, %v398
        %v400 = vrot.slane %v399, 2
        %v401 = vmax.f32 %v399, %v400
        %v402 = vrot.slane %v401, 1
        %v403 = vmax.f32 %v401, %v402
        %v404 = vsel %vm396, %v393, -inf
        %v405 = vrot.slane %v404, 4
        %v406 = vmax.f32 %v404, %v405
        %v407 = vrot.slane %v406, 2
        %v408 = vmax.f32 %v406, %v407
        %v409 = vrot.slane %v408, 1
        %v410 = vmax.f32 %v408, %v409
        %v411 = vsel %vm396, %v394, -inf
        %v412 = vrot.slane %v411, 4
        %v413 = vmax.f32 %v411, %v412
        %v414 = vrot.slane %v413, 2
        %v415 = vmax.f32 %v413, %v414
        %v416 = vrot.slane %v415, 1
        %v417 = vmax.f32 %v415, %v416
        %v418 = vsel %vm396, %v395, -inf
        %v419 = vrot.slane %v418, 4
        %v420 = vmax.f32 %v418, %v419
        %v421 = vrot.slane %v420, 2
        %v422 = vmax.f32 %v420, %v421
        %v423 = vrot.slane %v422, 1
        %v424 = vmax.f32 %v422, %v423
        %vm425 = vcmp.lt.s32.totalorder %v211, 5
        %vm426 = vmand %vm257, %vm425
        %v427 = vsel %vm426, 1, 0
        %vm428 = vcmp.eq.s32.totalorder %v427, 1
        %v433 = vsel %vm266, %v410, %v403
        %v434 = vsel %vm268, %v417, %v433
        %v435 = vsel %vm270, %v424, %v434
        %v437 = vsel %vm428, %v435, -inf
        %v438 = vsel %vm274, %v437, -inf
        %439 = vmax.xlane.f32.xlu0 %v438
        %v440 = vpop.xlane.xlu0 %439
        %v441 = vmax.f32 %v440, 0.0
        %vm442 = vcmp.ge.s32.totalorder %v211, 5
        %vm443 = vcmp.lt.s32.totalorder %v211, 11
        %vm444 = vmand %vm442, %vm443
        %v445 = vsel %vm444, 1, 0
        %vm446 = vcmp.eq.s32.totalorder %v445, 1
        %v447 = vsel %vm446, %v435, -inf
        %v448 = vsel %vm274, %v447, -inf
        %449 = vmax.xlane.f32.xlu0 %v448
        %v450 = vpop.xlane.xlu0 %449
        %v451 = vmax.f32 %v450, 0.0
        %vm452 = vcmp.ge.s32.totalorder %v211, 11
        %vm453 = vmand %vm452, %vm258
        %v454 = vsel %vm453, 1, 0
        %vm455 = vcmp.eq.s32.totalorder %v454, 1
        %v456 = vsel %vm455, %v435, -inf
        %v457 = vsel %vm274, %v456, -inf
        %458 = vmax.xlane.f32.xlu0 %v457
        %v459 = vpop.xlane.xlu0 %458
        %v460 = vmax.f32 %v459, 0.0
        %v461 = vld [vmem:[%s174 + $0x5] sm:$0x3f]
        %v462 = vld [vmem:[%s174 + $0x15] sm:$0x3f]
        %v463 = vld [vmem:[%s174 + $0x25] sm:$0x3f]
        %v464 = vld [vmem:[%s174 + $0x35] sm:$0x3f]
        %vm465 = vcmask 128000
        %v466 = vsel %vm465, %v461, -inf
        %v467 = vrot.slane %v466, 4
        %v468 = vmax.f32 %v466, %v467
        %v469 = vrot.slane %v468, 2
        %v470 = vmax.f32 %v468, %v469
        %v471 = vrot.slane %v470, 1
        %v472 = vmax.f32 %v470, %v471
        %v473 = vsel %vm465, %v462, -inf
        %v474 = vrot.slane %v473, 4
        %v475 = vmax.f32 %v473, %v474
        %v476 = vrot.slane %v475, 2
        %v477 = vmax.f32 %v475, %v476
        %v478 = vrot.slane %v477, 1
        %v479 = vmax.f32 %v477, %v478
        %v480 = vsel %vm465, %v463, -inf
        %v481 = vrot.slane %v480, 4
        %v482 = vmax.f32 %v480, %v481
        %v483 = vrot.slane %v482, 2
        %v484 = vmax.f32 %v482, %v483
        %v485 = vrot.slane %v484, 1
        %v486 = vmax.f32 %v484, %v485
        %v487 = vsel %vm465, %v464, -inf
        %v488 = vrot.slane %v487, 4
        %v489 = vmax.f32 %v487, %v488
        %v490 = vrot.slane %v489, 2
        %v491 = vmax.f32 %v489, %v490
        %v492 = vrot.slane %v491, 1
        %v493 = vmax.f32 %v491, %v492
        %v498 = vsel %vm266, %v479, %v472
        %v499 = vsel %vm268, %v486, %v498
        %v500 = vsel %vm270, %v493, %v499
        %v502 = vsel %vm428, %v500, -inf
        %v503 = vsel %vm274, %v502, -inf
        %504 = vmax.xlane.f32.xlu0 %v503
        %v505 = vpop.xlane.xlu0 %504
        %v506 = vmax.f32 %v505, 0.0
        %v507 = vsel %vm446, %v500, -inf
        %v508 = vsel %vm274, %v507, -inf
        %509 = vmax.xlane.f32.xlu0 %v508
        %v510 = vpop.xlane.xlu0 %509
        %v511 = vsel %vm455, %v500, -inf
        %v512 = vsel %vm274, %v511, -inf
        %513 = vmax.xlane.f32.xlu0 %v512
        %v514 = vpop.xlane.xlu0 %513
        %v515 = vmax.f32 %v514, 0.0
        %v516 = vld [vmem:[%s174 + $0xb] sm:$0x1f]
        %v517 = vld [vmem:[%s174 + $0x1b] sm:$0x1f]
        %v518 = vld [vmem:[%s174 + $0x2b] sm:$0x1f]
        %v519 = vld [vmem:[%s174 + $0x3b] sm:$0x1f]
        %v520 = vsel %vm396, %v516, -inf
        %v521 = vrot.slane %v520, 4
        %v522 = vmax.f32 %v520, %v521
        %v523 = vrot.slane %v522, 2
        %v524 = vmax.f32 %v522, %v523
        %v525 = vrot.slane %v524, 1
        %v526 = vmax.f32 %v524, %v525
        %v527 = vsel %vm396, %v517, -inf
        %v528 = vrot.slane %v527, 4
        %v529 = vmax.f32 %v527, %v528
        %v530 = vrot.slane %v529, 2
        %v531 = vmax.f32 %v529, %v530
        %v532 = vrot.slane %v531, 1
        %v533 = vmax.f32 %v531, %v532
        %v534 = vsel %vm396, %v518, -inf
        %v535 = vrot.slane %v534, 4
        %v536 = vmax.f32 %v534, %v535
        %v537 = vrot.slane %v536, 2
        %v538 = vmax.f32 %v536, %v537
        %v539 = vrot.slane %v538, 1
        %v540 = vmax.f32 %v538, %v539
        %v541 = vsel %vm396, %v519, -inf
        %v542 = vrot.slane %v541, 4
        %v543 = vmax.f32 %v541, %v542
        %v544 = vrot.slane %v543, 2
        %v545 = vmax.f32 %v543, %v544
        %v546 = vrot.slane %v545, 1
        %v547 = vmax.f32 %v545, %v546
        %v552 = vsel %vm266, %v533, %v526
        %v553 = vsel %vm268, %v540, %v552
        %v554 = vsel %vm270, %v547, %v553
        %v556 = vsel %vm428, %v554, -inf
        %v557 = vsel %vm274, %v556, -inf
        %558 = vmax.xlane.f32.xlu0 %v557
        %v559 = vpop.xlane.xlu0 %558
        %v560 = vmax.f32 %v559, 0.0
        %v561 = vsel %vm446, %v554, -inf
        %v562 = vsel %vm274, %v561, -inf
        %563 = vmax.xlane.f32.xlu0 %v562
        %v564 = vpop.xlane.xlu0 %563
        %v565 = vmax.f32 %v564, 0.0
        %v566 = vsel %vm455, %v554, -inf
        %v567 = vsel %vm274, %v566, -inf
        %568 = vmax.xlane.f32.xlu0 %v567
        %v569 = vpop.xlane.xlu0 %568
        %v570 = vmax.f32 %v569, 0.0
        %v571 = vsel %vm384, %v441, %v451
        %v572 = vsel %vm386, %v571, %v460
        %v573 = vsel %vm388, %v572, %v506
        %vm574 = vcmask 31744
        %v575 = vsel %vm574, %v573, %v510
        %vm576 = vcmask 39936
        %v577 = vsel %vm576, %v575, %v515
        %vm578 = vcmask 48128
        %v579 = vsel %vm578, %v577, %v560
        %vm580 = vcmask 56320
        %v581 = vsel %vm580, %v579, %v565
        %vm582 = vcmask 64512
        %v583 = vsel %vm582, %v581, %v570
        %vm584 = vcmask 68608
        %585 = vst.msk [vmem:[%s205] sm:$0xf] %vm584, %v583
        %p586 = scmp.lt.s32.totalorder %s24, 1
        %s587 = scalar_select %p586, %s24, 1
        %s588 = smul.addr %s587, 4
        %s589 = scalar_lea.vmem %s1, %s588
        %s590 = sand.u32 %s84, 1
        %s591 = scalar_lea.sflag [#allocation4], %s590
        %s592 = sand.u32 %s84, 1
        %s593 = smul.addr %s592, 4
        %s594 = scalar_lea.vmem [#allocation5], %s593
        %s595 = sand.u32 %s110, 1
        %s596 = scalar_lea.sflag [#allocation7], %s595
        %s597 = sand.u32 %s110, 1
        %s598 = smul.addr %s597, 4
        %s599 = scalar_lea.vmem [#allocation6], %s598
        // Predicated region
        $region29: #{tpu_custom_call.1} parent=23 // pred_check
          %p600 = pneg %p68
        $region30: #{tpu_custom_call.1} parent=23 // pred_check_branch
          %602 = sbr.rel (%p600) target = $region32
        $region31: #{tpu_custom_call.1} parent=23 // pred_region
          _
        $region32: #{tpu_custom_call.1} parent=23 // pred_fallthru
          _
        // Predicated region
        $region33: #{tpu_custom_call.1} parent=23 // pred_check
          %p603 = pneg %p94
        $region34: #{tpu_custom_call.1} parent=23 // pred_check_branch
          %605 = sbr.rel (%p603) target = $region36
        $region35: #{tpu_custom_call.1} parent=23 // pred_region
          %s607 = ssub.s32 64, 64
          %608 = vsyncadd %s591, %s607
          %s609 = smul.addr %s24, 64
          %s610 = scalar_lea.hbm %s2, %s609
          %s612 = sshll.u32 %s594, 4
          %s613 = int_to_ptr.vmem [resolvable:$true] %s612
          %615 = dma.vmem_to_hbm [thread:$0]  %s613, 64, %s610, %s591
        $region36: #{tpu_custom_call.1} parent=23 // pred_fallthru
          _
        // Predicated region
        $region37: #{tpu_custom_call.1} parent=23 // pred_check
          %p616 = pneg %p120
        $region38: #{tpu_custom_call.1} parent=23 // pred_check_branch
          %618 = sbr.rel (%p616) target = $region40
        $region39: #{tpu_custom_call.1} parent=23 // pred_region
          %s620 = ssub.s32 64, 64
          %621 = vsyncadd %s596, %s620
          %s622 = smul.addr %s24, 64
          %s623 = scalar_lea.hbm %s3, %s622
          %s625 = sshll.u32 %s599, 4
          %s626 = int_to_ptr.vmem [resolvable:$true] %s625
          %628 = dma.vmem_to_hbm [thread:$0]  %s626, 64, %s623, %s596
        $region40: #{tpu_custom_call.1} parent=23 // pred_fallthru
          _
      $region24: #{tpu_custom_call.1} parent=5 // pred_fallthru
        _
      %p629 = scmp.le.s32.totalorder 2, %s19
      // Predicated region
      $region41: #{tpu_custom_call.1} parent=5 // pred_check
        %p630 = pneg %p629
      $region42: #{tpu_custom_call.1} parent=5 // pred_check_branch
        %632 = sbr.rel (%p630) target = $region44
      $region43: #{tpu_custom_call.1} parent=5 // pred_region
        %s633 = ssub.s32 %s19, 2
        // Predicated region
        $region45: #{tpu_custom_call.1} parent=43 // pred_check
          %p634 = pneg %p74
        $region46: #{tpu_custom_call.1} parent=43 // pred_check_branch
          %636 = sbr.rel (%p634) target = $region48
        $region47: #{tpu_custom_call.1} parent=43 // pred_region
          %p637 = scmp.lt.s32.totalorder %s25, 1
          %s638 = scalar_select %p637, %s25, 1
          %s639 = smul.addr %s638, 4
          %s640 = scalar_lea.vmem %s1, %s639
        $region48: #{tpu_custom_call.1} parent=43 // pred_fallthru
          _
        // Predicated region
        $region49: #{tpu_custom_call.1} parent=43 // pred_check
          %p641 = pneg %p100
        $region50: #{tpu_custom_call.1} parent=43 // pred_check_branch
          %643 = sbr.rel (%p641) target = $region52
        $region51: #{tpu_custom_call.1} parent=43 // pred_region
          %s644 = sand.u32 %s85, 1
          %s645 = scalar_lea.sflag [#allocation4], %s644
          %s646 = sand.u32 %s85, 1
          %s647 = smul.addr %s646, 4
          %s648 = scalar_lea.vmem [#allocation5], %s647
          %649 = dma.done %s645, 64
        $region52: #{tpu_custom_call.1} parent=43 // pred_fallthru
          _
        // Predicated region
        $region53: #{tpu_custom_call.1} parent=43 // pred_check
          %p650 = pneg %p126
        $region54: #{tpu_custom_call.1} parent=43 // pred_check_branch
          %652 = sbr.rel (%p650) target = $region56
        $region55: #{tpu_custom_call.1} parent=43 // pred_region
          %s653 = sand.u32 %s111, 1
          %s654 = scalar_lea.sflag [#allocation7], %s653
          %s655 = sand.u32 %s111, 1
          %s656 = smul.addr %s655, 4
          %s657 = scalar_lea.vmem [#allocation6], %s656
          %658 = dma.done %s654, 64
        $region56: #{tpu_custom_call.1} parent=43 // pred_fallthru
          _
      $region44: #{tpu_custom_call.1} parent=5 // pred_fallthru
        _
    $region6: #{tpu_custom_call.1} parent=1 // loop_footer
      %s23 = sadd.s32 1, %s19
    $region7: #{tpu_custom_call.1} parent=1 // loop_footer_branch
      %18 = sbr.rel target = $region3
    $region8: #{tpu_custom_call.1} parent=1 // loop_exit
      _
    %659 = vsyncpa [#allocation3], 1
    %s660 = scalar_lea.sflag [#allocation3], 1
    %661 = vsyncpa %s660, 1
    %662 = vsyncpa [#allocation4], 1
    %s663 = scalar_lea.sflag [#allocation4], 1
    %664 = vsyncpa %s663, 1
    %665 = vsyncpa [#allocation7], 1
    %s666 = scalar_lea.sflag [#allocation7], 1
    %667 = vsyncpa %s666, 1

</llo_original>
